<compile_context>
chip_gen: v7x
topology: tpu7x:2x2x1
jax: 0.10.0
libtpu: 0.0.40
codegen_flags: <defaults>
</compile_context>

<pallas_src>
import jax
import jax.numpy as jnp
from jax.experimental import pallas as pl
from jax.experimental.pallas import tpu as pltpu


def _round_up(x, m):
    return ((x + m - 1) // m) * m


def _sampler_kernel(const_ref, o_ref, d_ref, out_ref):
    # const_ref: (6, 3P) resident f32 constants:
    #   rows 0..2 : e_c   one-hot component masks   e_c[3p+k]  = (k == c)
    #   rows 3..5 : zc_c  depth-scaled masks        zc_c[3p+k] = z[p] * (k == c)
    # o_ref, d_ref: (TN, 3)  ray origins / directions (rays on the sublane axis)
    # out_ref:      (TN, 3P) flattened points: out[n, 3p+c] = o[n,c] + z[p]*d[n,c]
    o = o_ref[...]
    d = d_ref[...]
    c = const_ref[...]
    acc = o[:, 0:1] * c[0:1, :]
    acc = acc + o[:, 1:2] * c[1:2, :]
    acc = acc + o[:, 2:3] * c[2:3, :]
    acc = acc + d[:, 0:1] * c[3:4, :]
    acc = acc + d[:, 1:2] * c[4:5, :]
    acc = acc + d[:, 2:3] * c[5:6, :]
    out_ref[...] = acc.astype(out_ref.dtype)


def _choose_tile_n(n_rays, p, *, vmem_budget_bytes=24 << 20, cap=4096):
    # Double-buffered output block (tn * 3P * 4B) dominates VMEM; inputs and
    # the (6, 3P) constants are noise.  Budget kept <= 24 MiB so the same tile
    # is safe on v7x's 64 MiB physical / 32 MiB default scoped VMEM.
    bytes_per_ray = 3 * p * 4 + 2 * 3 * 4
    max_tn = vmem_budget_bytes // (2 * bytes_per_ray)
    tn = min(cap, max(8, max_tn), _round_up(n_rays, 8))
    # Keep >= 2 grid steps on large problems so the "parallel" grid axis can
    # actually shard across v7x's two TensorCores.
    if n_rays > 2048 and 2 * tn > _round_up(n_rays, 8):
        tn = _round_up(-(-n_rays // 2), 8)
    return max(8, (tn // 8) * 8)


def stratified_raysampler(origins, directions, *, n_pts_per_ray, min_depth,
                          max_depth, tile_n=None, vmem_budget_bytes=24 << 20):
    """origins, directions: (N, 3). Returns (points (N,P,3), lengths (N,P,1))."""
    n_rays = int(origins.shape[0])
    p = int(n_pts_per_ray)
    out_dtype = origins.dtype

    # Exact-endpoint linspace (same semantics as torch.linspace).
    z = jnp.linspace(jnp.float32(min_depth), jnp.float32(max_depth), p,
                     dtype=jnp.float32)                                # (P,)

    # Resident constants: e[c, 3p+k] = (k==c); zc[c, 3p+k] = z[p]*(k==c).
    e = jnp.tile(jnp.eye(3, dtype=jnp.float32), (1, p))                # (3, 3P)
    zrep = jnp.repeat(z, 3)                                            # (3P,)
    const = jnp.concatenate([e, e * zrep[None, :]], axis=0)            # (6, 3P)

    o_f = origins.astype(jnp.float32)
    d_f = directions.astype(jnp.float32)

    if tile_n is None:
        tn = _choose_tile_n(n_rays, p, vmem_budget_bytes=vmem_budget_bytes)
    else:
        tn = min(_round_up(max(int(tile_n), 8), 8), _round_up(n_rays, 8))

    grid = (pl.cdiv(n_rays, tn),)

    # vmem_limit derived from the actual footprint (double-buffered blocks).
    out_block = tn * 3 * p * 4
    in_block = tn * 3 * 4
    const_block = 6 * 3 * p * 4
    footprint = 2 * (out_block + 2 * in_block + const_block)
    vmem_limit = int(min(max(2 * footprint, 8 << 20), 48 << 20))

    grid_spec = pltpu.PrefetchScalarGridSpec(
        num_scalar_prefetch=0,
        grid=grid,
        in_specs=[
            pl.BlockSpec((6, 3 * p), lambda i: (0, 0)),   # constants (resident)
            pl.BlockSpec((tn, 3), lambda i: (i, 0)),      # origins
            pl.BlockSpec((tn, 3), lambda i: (i, 0)),      # directions
        ],
        out_specs=pl.BlockSpec((tn, 3 * p), lambda i: (i, 0)),
    )

    pts_flat = pl.pallas_call(
        _sampler_kernel,
        out_shape=jax.ShapeDtypeStruct((n_rays, 3 * p), out_dtype),
        grid_spec=grid_spec,
        compiler_params=pltpu.CompilerParams(
            dimension_semantics=("parallel",),
            vmem_limit_bytes=vmem_limit),
    )(const, o_f, d_f)

    # Free row-major reshape: out[n, 3p+c] -> points[n, p, c].  No transpose.
    sample_points = pts_flat.reshape(n_rays, p, 3)
    sample_lengths = jnp.broadcast_to(z[None, :, None].astype(out_dtype),
                                      (n_rays, p, 1))
    return sample_points, sample_lengths


if __name__ == "__main__":
    # cfg for the synthetic module
    N_RAYS = 16
    N_PTS_PER_RAY = 64
    MIN_DEPTH = 0.1
    MAX_DEPTH = 5.0

    key = jax.random.PRNGKey(0)
    k_o, k_d = jax.random.split(key)
    origins = jax.random.normal(k_o, (N_RAYS, 3), dtype=jnp.float32)
    directions = jax.random.normal(k_d, (N_RAYS, 3), dtype=jnp.float32)
    directions = directions / jnp.linalg.norm(directions, axis=-1, keepdims=True)

    pts, lens = stratified_raysampler(
        origins, directions,
        n_pts_per_ray=N_PTS_PER_RAY,
        min_depth=MIN_DEPTH, max_depth=MAX_DEPTH,
    )
    pts = jax.block_until_ready(pts)
    lens = jax.block_until_ready(lens)

    # Pure-JAX reference (same math as the PyTorch forward).
    z_ref = jnp.linspace(MIN_DEPTH, MAX_DEPTH, N_PTS_PER_RAY, dtype=jnp.float32)
    pts_ref = origins[:, None, :] + directions[:, None, :] * z_ref[None, :, None]
    lens_ref = jnp.broadcast_to(z_ref[None, :, None],
                                (N_RAYS, N_PTS_PER_RAY, 1)).astype(jnp.float32)

    assert pts.shape == (N_RAYS, N_PTS_PER_RAY, 3)
    assert lens.shape == (N_RAYS, N_PTS_PER_RAY, 1)
    assert jnp.allclose(pts, pts_ref, atol=1e-5, rtol=1e-5)
    assert jnp.allclose(lens, lens_ref, atol=1e-5, rtol=1e-5)

    print("KERNEL_OK")
</pallas_src>

<mosaic_0001>
module attributes {stable_mosaic.version = 11 : i64} {
  func.func @_sampler_kernel(%arg0: i32, %arg1: memref<6x192xf32, #tpu.memory_space<vmem>>, %arg2: memref<16x3xf32, #tpu.memory_space<vmem>>, %arg3: memref<16x3xf32, #tpu.memory_space<vmem>>, %arg4: memref<16x192xf32, #tpu.memory_space<vmem>>) attributes {dimension_semantics = [#tpu.dimension_semantics<parallel>], iteration_bounds = array<i64: 1>, scalar_prefetch = 0 : i64, scratch_operands = 0 : i64, tpu.core_type = #tpu.core_type<tc>, window_params = [{pipeline_mode = #tpu.pipeline_mode<synchronous>, transform_indices = @transform_0, window_bounds = array<i64: 6, 192>}, {transform_indices = @transform_1, window_bounds = array<i64: 16, 3>}, {transform_indices = @transform_2, window_bounds = array<i64: 16, 3>}, {transform_indices = @transform_3, window_bounds = array<i64: 16, 192>}]} {
    %c0 = arith.constant 0 : index
    %c0_0 = arith.constant 0 : index
    %0 = vector.load %arg2[%c0, %c0_0] : memref<16x3xf32, #tpu.memory_space<vmem>>, vector<16x3xf32>
    %c0_1 = arith.constant 0 : index
    %c0_2 = arith.constant 0 : index
    %1 = vector.load %arg3[%c0_1, %c0_2] : memref<16x3xf32, #tpu.memory_space<vmem>>, vector<16x3xf32>
    %c0_3 = arith.constant 0 : index
    %c0_4 = arith.constant 0 : index
    %2 = vector.load %arg1[%c0_3, %c0_4] : memref<6x192xf32, #tpu.memory_space<vmem>>, vector<6x192xf32>
    %3 = vector.extract_strided_slice %0 {offsets = [0, 0], sizes = [16, 1], strides = [1, 1]} : vector<16x3xf32> to vector<16x1xf32>
    %4 = vector.extract_strided_slice %2 {offsets = [0, 0], sizes = [1, 192], strides = [1, 1]} : vector<6x192xf32> to vector<1x192xf32>
    %5 = vector.broadcast %3 : vector<16x1xf32> to vector<16x192xf32>
    %6 = vector.broadcast %4 : vector<1x192xf32> to vector<16x192xf32>
    %7 = arith.mulf %5, %6 : vector<16x192xf32>
    %8 = vector.extract_strided_slice %0 {offsets = [0, 1], sizes = [16, 1], strides = [1, 1]} : vector<16x3xf32> to vector<16x1xf32>
    %9 = vector.extract_strided_slice %2 {offsets = [1, 0], sizes = [1, 192], strides = [1, 1]} : vector<6x192xf32> to vector<1x192xf32>
    %10 = vector.broadcast %8 : vector<16x1xf32> to vector<16x192xf32>
    %11 = vector.broadcast %9 : vector<1x192xf32> to vector<16x192xf32>
    %12 = arith.mulf %10, %11 : vector<16x192xf32>
    %13 = arith.addf %7, %12 : vector<16x192xf32>
    %14 = vector.extract_strided_slice %0 {offsets = [0, 2], sizes = [16, 1], strides = [1, 1]} : vector<16x3xf32> to vector<16x1xf32>
    %15 = vector.extract_strided_slice %2 {offsets = [2, 0], sizes = [1, 192], strides = [1, 1]} : vector<6x192xf32> to vector<1x192xf32>
    %16 = vector.broadcast %14 : vector<16x1xf32> to vector<16x192xf32>
    %17 = vector.broadcast %15 : vector<1x192xf32> to vector<16x192xf32>
    %18 = arith.mulf %16, %17 : vector<16x192xf32>
    %19 = arith.addf %13, %18 : vector<16x192xf32>
    %20 = vector.extract_strided_slice %1 {offsets = [0, 0], sizes = [16, 1], strides = [1, 1]} : vector<16x3xf32> to vector<16x1xf32>
    %21 = vector.extract_strided_slice %2 {offsets = [3, 0], sizes = [1, 192], strides = [1, 1]} : vector<6x192xf32> to vector<1x192xf32>
    %22 = vector.broadcast %20 : vector<16x1xf32> to vector<16x192xf32>
    %23 = vector.broadcast %21 : vector<1x192xf32> to vector<16x192xf32>
    %24 = arith.mulf %22, %23 : vector<16x192xf32>
    %25 = arith.addf %19, %24 : vector<16x192xf32>
    %26 = vector.extract_strided_slice %1 {offsets = [0, 1], sizes = [16, 1], strides = [1, 1]} : vector<16x3xf32> to vector<16x1xf32>
    %27 = vector.extract_strided_slice %2 {offsets = [4, 0], sizes = [1, 192], strides = [1, 1]} : vector<6x192xf32> to vector<1x192xf32>
    %28 = vector.broadcast %26 : vector<16x1xf32> to vector<16x192xf32>
    %29 = vector.broadcast %27 : vector<1x192xf32> to vector<16x192xf32>
    %30 = arith.mulf %28, %29 : vector<16x192xf32>
    %31 = arith.addf %25, %30 : vector<16x192xf32>
    %32 = vector.extract_strided_slice %1 {offsets = [0, 2], sizes = [16, 1], strides = [1, 1]} : vector<16x3xf32> to vector<16x1xf32>
    %33 = vector.extract_strided_slice %2 {offsets = [5, 0], sizes = [1, 192], strides = [1, 1]} : vector<6x192xf32> to vector<1x192xf32>
    %34 = vector.broadcast %32 : vector<16x1xf32> to vector<16x192xf32>
    %35 = vector.broadcast %33 : vector<1x192xf32> to vector<16x192xf32>
    %36 = arith.mulf %34, %35 : vector<16x192xf32>
    %37 = arith.addf %31, %36 : vector<16x192xf32>
    %c0_5 = arith.constant 0 : index
    %c0_6 = arith.constant 0 : index
    %38 = vector.load %arg4[%c0_5, %c0_6] : memref<16x192xf32, #tpu.memory_space<vmem>>, vector<16x192xf32>
    tpu.vector_store %arg4[%c0_5, %c0_6], %37 {strides = array<i32>} : memref<16x192xf32, #tpu.memory_space<vmem>>, vector<16x192xf32>,
    return
  }
  func.func @transform_0(%arg0: i32) -> (i32, i32) {
    %c0_i32 = arith.constant 0 : i32
    %c0_i32_0 = arith.constant 0 : i32
    %c0_i32_1 = arith.constant 0 : i32
    return %c0_i32, %c0_i32_0 : i32, i32
  }
  func.func @transform_1(%arg0: i32) -> (i32, i32) {
    %c0_i32 = arith.constant 0 : i32
    %c0_i32_0 = arith.constant 0 : i32
    return %arg0, %c0_i32 : i32, i32
  }
  func.func @transform_2(%arg0: i32) -> (i32, i32) {
    %c0_i32 = arith.constant 0 : i32
    %c0_i32_0 = arith.constant 0 : i32
    return %arg0, %c0_i32 : i32, i32
  }
  func.func @transform_3(%arg0: i32) -> (i32, i32) {
    %c0_i32 = arith.constant 0 : i32
    %c0_i32_0 = arith.constant 0 : i32
    return %arg0, %c0_i32 : i32, i32
  }
}

</mosaic_0001>

<llo_original>
// kernel: tpu_custom_call.1
$region0: #{tpu_custom_call.1}
  #allocation0 [shape = 'u32[]', space=smem, size = 0x4, offset = 0x4, fixed_abs, tag = 'smem constant byte address 0x4 - core index']
  #allocation1 [shape = 'u32[144,128]{1,0:T(1,128)}', space=vmem, size = 0x12000, scoped, tag = 'internal scratch']
  %s0 = inlined_call_operand.vmem [shape: f32[6,192], index: 0, kind: input, shape index: {}]
  %s1 = inlined_call_operand.vmem [shape: f32[16,3], index: 1, kind: input, shape index: {}]
  %s2 = inlined_call_operand.vmem [shape: f32[16,3], index: 2, kind: input, shape index: {}]
  %s3 = inlined_call_operand.hbm [shape: f32[16,192], index: 3, kind: output, shape index: {}]
  %s4 = sld [smem:[#allocation0]]
  $region22: #{tpu_custom_call.1} parent=0
    _
  %s6 = ssub.s32 1, %s4
  %s7 = scalar_select 0, %s6, %s4
  $region1: #{tpu_custom_call.1} parent=0
    #allocation2 [shape = 'u8[16384]{0}', space=vmem, size = 0x4000, scoped, tag = 'output window, operand 0, single buffered']
    #allocation3 [shape = 's32[1]{0}', space=sflag, size = 0x4, scoped, tag = 'scoped memory for tpu_custom_call.1']
    %8 = vsyncpa [#allocation3], 0
    // Predicated region
    $region2: #{tpu_custom_call.1} parent=1 // pred_check
      _
    $region3: #{tpu_custom_call.1} parent=1 // pred_check_branch
      %10 = sbr.rel (0) target = $region5
    $region4: #{tpu_custom_call.1} parent=1 // pred_region
      _
    $region5: #{tpu_custom_call.1} parent=1 // pred_fallthru
      _
    // Predicated region
    $region6: #{tpu_custom_call.1} parent=1 // pred_check
      _
    $region7: #{tpu_custom_call.1} parent=1 // pred_check_branch
      %12 = sbr.rel (0) target = $region9
    $region8: #{tpu_custom_call.1} parent=1 // pred_region
      _
    $region9: #{tpu_custom_call.1} parent=1 // pred_fallthru
      _
    // Predicated region
    $region10: #{tpu_custom_call.1} parent=1 // pred_check
      _
    $region11: #{tpu_custom_call.1} parent=1 // pred_check_branch
      %14 = sbr.rel (0) target = $region13
    $region12: #{tpu_custom_call.1} parent=1 // pred_region
      _
    $region13: #{tpu_custom_call.1} parent=1 // pred_fallthru
      _
    %v15 = vld [vmem:[%s1] sm:$0xff]
    %v16 = vld [vmem:[%s1 + $0x8] sm:$0xff]
    %v17 = vld [vmem:[%s2] sm:$0xff]
    %v18 = vld [vmem:[%s2 + $0x8] sm:$0xff]
    %v19 = vld [vmem:[%s0] sm:$0x3f]
    %v20 = vld [vmem:[%s0 + $0x8] sm:$0x3f]
    %22 = vset.pattern.permute.xlu0 0
    %23 = vperm.xlu0 %22, %v15
    %v24 = vpop.permute.xlu0 %23
    %27 = vset.pattern.permute.xlu0 0
    %28 = vperm.xlu0 %27, %v16
    %v29 = vpop.permute.xlu0 %28
    %v31 = vlaneseq
    %v32 = vshrl.u32 %v31, 7
    %v33 = vsub.s32 0, %v32
    %v34 = vrot.slane %v19, %v33
    %v35 = vlaneseq
    %v36 = vshrl.u32 %v35, 7
    %v37 = vsub.s32 0, %v36
    %v38 = vrot.slane %v20, %v37
    %v39 = vmul.f32 %v24, %v34
    %v40 = vmul.f32 %v24, %v38
    %v41 = vmul.f32 %v29, %v34
    %v42 = vmul.f32 %v29, %v38
    %43 = vset.pattern.permute.xlu0 1
    %44 = vperm.xlu0 %43, %v15
    %v45 = vpop.permute.xlu0 %44
    %47 = vset.pattern.permute.xlu0 1
    %48 = vperm.xlu0 %47, %v16
    %v49 = vpop.permute.xlu0 %48
    %v51 = vlaneseq
    %v52 = vshrl.u32 %v51, 7
    %v53 = vsub.s32 1, %v52
    %v54 = vrot.slane %v19, %v53
    %v55 = vlaneseq
    %v56 = vshrl.u32 %v55, 7
    %v57 = vsub.s32 1, %v56
    %v58 = vrot.slane %v20, %v57
    %v59 = vmul.f32 %v45, %v54
    %v60 = vmul.f32 %v45, %v58
    %v61 = vmul.f32 %v49, %v54
    %v62 = vmul.f32 %v49, %v58
    %v63 = vadd.f32 %v39, %v59
    %v64 = vadd.f32 %v40, %v60
    %v65 = vadd.f32 %v41, %v61
    %v66 = vadd.f32 %v42, %v62
    %67 = vset.pattern.permute.xlu0 2
    %68 = vperm.xlu0 %67, %v15
    %v69 = vpop.permute.xlu0 %68
    %71 = vset.pattern.permute.xlu0 2
    %72 = vperm.xlu0 %71, %v16
    %v73 = vpop.permute.xlu0 %72
    %v75 = vlaneseq
    %v76 = vshrl.u32 %v75, 7
    %v77 = vsub.s32 2, %v76
    %v78 = vrot.slane %v19, %v77
    %v79 = vlaneseq
    %v80 = vshrl.u32 %v79, 7
    %v81 = vsub.s32 2, %v80
    %v82 = vrot.slane %v20, %v81
    %v83 = vmul.f32 %v69, %v78
    %v84 = vmul.f32 %v69, %v82
    %v85 = vmul.f32 %v73, %v78
    %v86 = vmul.f32 %v73, %v82
    %v87 = vadd.f32 %v63, %v83
    %v88 = vadd.f32 %v64, %v84
    %v89 = vadd.f32 %v65, %v85
    %v90 = vadd.f32 %v66, %v86
    %92 = vset.pattern.permute.xlu0 0
    %93 = vperm.xlu0 %92, %v17
    %v94 = vpop.permute.xlu0 %93
    %97 = vset.pattern.permute.xlu0 0
    %98 = vperm.xlu0 %97, %v18
    %v99 = vpop.permute.xlu0 %98
    %v101 = vlaneseq
    %v102 = vshrl.u32 %v101, 7
    %v103 = vsub.s32 3, %v102
    %v104 = vrot.slane %v19, %v103
    %v105 = vlaneseq
    %v106 = vshrl.u32 %v105, 7
    %v107 = vsub.s32 3, %v106
    %v108 = vrot.slane %v20, %v107
    %v109 = vmul.f32 %v94, %v104
    %v110 = vmul.f32 %v94, %v108
    %v111 = vmul.f32 %v99, %v104
    %v112 = vmul.f32 %v99, %v108
    %v113 = vadd.f32 %v87, %v109
    %v114 = vadd.f32 %v88, %v110
    %v115 = vadd.f32 %v89, %v111
    %v116 = vadd.f32 %v90, %v112
    %117 = vset.pattern.permute.xlu0 1
    %118 = vperm.xlu0 %117, %v17
    %v119 = vpop.permute.xlu0 %118
    %121 = vset.pattern.permute.xlu0 1
    %122 = vperm.xlu0 %121, %v18
    %v123 = vpop.permute.xlu0 %122
    %v125 = vlaneseq
    %v126 = vshrl.u32 %v125, 7
    %v127 = vsub.s32 4, %v126
    %v128 = vrot.slane %v19, %v127
    %v129 = vlaneseq
    %v130 = vshrl.u32 %v129, 7
    %v131 = vsub.s32 4, %v130
    %v132 = vrot.slane %v20, %v131
    %v133 = vmul.f32 %v119, %v128
    %v134 = vmul.f32 %v119, %v132
    %v135 = vmul.f32 %v123, %v128
    %v136 = vmul.f32 %v123, %v132
    %v137 = vadd.f32 %v113, %v133
    %v138 = vadd.f32 %v114, %v134
    %v139 = vadd.f32 %v115, %v135
    %v140 = vadd.f32 %v116, %v136
    %141 = vset.pattern.permute.xlu0 2
    %142 = vperm.xlu0 %141, %v17
    %v143 = vpop.permute.xlu0 %142
    %145 = vset.pattern.permute.xlu0 2
    %146 = vperm.xlu0 %145, %v18
    %v147 = vpop.permute.xlu0 %146
    %v149 = vlaneseq
    %v150 = vshrl.u32 %v149, 7
    %v151 = vsub.s32 5, %v150
    %v152 = vrot.slane %v19, %v151
    %v153 = vlaneseq
    %v154 = vshrl.u32 %v153, 7
    %v155 = vsub.s32 5, %v154
    %v156 = vrot.slane %v20, %v155
    %v157 = vmul.f32 %v143, %v152
    %v158 = vmul.f32 %v143, %v156
    %v159 = vmul.f32 %v147, %v152
    %v160 = vmul.f32 %v147, %v156
    %v161 = vadd.f32 %v137, %v157
    %v162 = vadd.f32 %v138, %v158
    %v163 = vadd.f32 %v139, %v159
    %v164 = vadd.f32 %v140, %v160
    %165 = vst [vmem:[#allocation2] sm:$0xff] %v161
    %vm166 = vcmask 523264
    %167 = vst.msk [vmem:[#allocation2 + $0x8] sm:$0xff] %vm166, %v162
    %168 = vst [vmem:[#allocation2 + $0x10] sm:$0xff] %v163
    %169 = vst.msk [vmem:[#allocation2 + $0x18] sm:$0xff] %vm166, %v164
    // Predicated region
    $region14: #{tpu_custom_call.1} parent=1 // pred_check
      _
    $region15: #{tpu_custom_call.1} parent=1 // pred_check_branch
      %171 = sbr.rel (0) target = $region17
    $region16: #{tpu_custom_call.1} parent=1 // pred_region
      %s173 = ssub.s32 512, 512
      %174 = vsyncadd [#allocation3], %s173
      %s175 = sshll.u32 [#allocation2], 4
      %s176 = int_to_ptr.vmem [resolvable:$true] %s175
      %181 = dma.vmem_to_hbm [thread:$0]  %s176, 512, %s3, [#allocation3], 256, 256, 16
    $region17: #{tpu_custom_call.1} parent=1 // pred_fallthru
      _
    // Predicated region
    $region18: #{tpu_custom_call.1} parent=1 // pred_check
      _
    $region19: #{tpu_custom_call.1} parent=1 // pred_check_branch
      %183 = sbr.rel (0) target = $region21
    $region20: #{tpu_custom_call.1} parent=1 // pred_region
      %184 = dma.done [#allocation3], 512
    $region21: #{tpu_custom_call.1} parent=1 // pred_fallthru
      _
    %185 = vsyncpa [#allocation3], 1

</llo_original>
